<compile_context>
chip_gen: v6e
topology: v6e:2x2x1
jax: 0.10.0
libtpu: 0.0.40
codegen_flags: <defaults>
</compile_context>

<pallas_src>
import jax
import jax.numpy as jnp
from jax.experimental import pallas as pl
from jax.experimental.pallas import tpu as pltpu


def _round_up(x: int, m: int) -> int:
    return (x + m - 1) // m * m


# ---------------------------------------------------------------------------
# Pallas kernel: y = relu(x @ W + b) for one row tile; W/b VMEM-resident.
# ---------------------------------------------------------------------------
def _linear_relu_kernel(x_ref, w_ref, b_ref, o_ref):
    # x_ref: (TM, H_in)  w_ref: (H_in, H_out)  b_ref: (1, H_out)  o_ref: (TM, H_out)
    acc = jnp.dot(x_ref[...], w_ref[...], preferred_element_type=jnp.float32)
    # Bias + ReLU epilogue in f32 on the VPU slot; single store of the tile.
    o_ref[...] = jnp.maximum(acc + b_ref[...], 0.0).astype(o_ref.dtype)


def linear_relu_pallas(x, w, b, *, max_block_rows: int = 1024,
                       use_bf16_operands: bool = True,
                       force_pallas: bool = False,
                       min_rows_for_pallas: int = 128):
    """relu(x @ w + b) as a Pallas TPU kernel with native (unpadded) shapes.

    x: (B, H_in) float, w: (H_in, H_out), b: (H_out,) or (1, H_out).
    """
    B, H_in = x.shape
    H_out = w.shape[1]
    b_f32 = jnp.asarray(b, jnp.float32).reshape(1, H_out)

    # Tiny-problem fast path: a single fused XLA op beats the fixed
    # pallas_call / grid-step overhead (~0.35 us) on every TPU generation.
    if not force_pallas and B < min_rows_for_pallas:
        y = jnp.dot(x.astype(jnp.float32), w.astype(jnp.float32)) + b_f32
        return jnp.maximum(y, 0.0).astype(x.dtype)

    # Operand dtype: bf16 halves the dominant HBM read of x on v5e/v6e/v7x
    # (MXU is bf16-native on all three); accumulation stays f32.
    op_dtype = jnp.bfloat16 if use_bf16_operands else x.dtype
    x_op = x.astype(op_dtype)
    w_op = w.astype(op_dtype)
    out_dtype = x.dtype

    # Row tile: multiple of 16 sublanes (bf16-friendly, fine for f32 too),
    # capped at max_block_rows and sized so the row grid has >= ~4 steps so the
    # "parallel" axis can actually be split across v7x's two TensorCores.
    tm = max(16, min(max_block_rows, _round_up(pl.cdiv(B, 4), 16)))
    grid = (pl.cdiv(B, tm),)

    itemsize = jnp.dtype(op_dtype).itemsize
    cost = pl.CostEstimate(
        flops=2 * B * H_in * H_out,
        transcendentals=0,
        bytes_accessed=(B * H_in * itemsize          # x read
                        + H_in * H_out * itemsize    # w read
                        + H_out * 4                  # b read
                        + B * H_out * jnp.dtype(out_dtype).itemsize),  # y write
    )

    out = pl.pallas_call(
        _linear_relu_kernel,
        out_shape=jax.ShapeDtypeStruct((B, H_out), out_dtype),
        grid=grid,
        in_specs=[
            # Row tile of x; last dim equals the full array dim (legal < 128).
            pl.BlockSpec((tm, H_in), lambda i: (i, 0)),
            # Grid-invariant operands: constant index_map -> VMEM-resident.
            pl.BlockSpec((H_in, H_out), lambda i: (0, 0)),
            pl.BlockSpec((1, H_out), lambda i: (0, 0)),
        ],
        out_specs=pl.BlockSpec((tm, H_out), lambda i: (i, 0)),
        compiler_params=pltpu.CompilerParams(
            dimension_semantics=("parallel",),   # v7x: shard rows over both TCs
        ),
        cost_estimate=cost,
    )(x_op, w_op, b_f32)

    return out


# ---------------------------------------------------------------------------
# Synthetic inner module (stand-in for the checkpoint-loaded SceneDreamer net)
# ---------------------------------------------------------------------------
class InnerLinearReLU:
    def __init__(self, hidden_in=32, hidden_out=32, seed=0):
        kw, kb = jax.random.split(jax.random.PRNGKey(seed))
        # Deterministic init, roughly matching nn.Linear's uniform fan-in init.
        bound = 1.0 / (hidden_in ** 0.5)
        self.w = jax.random.uniform(
            kw, (hidden_in, hidden_out), jnp.float32, -bound, bound)
        self.b = jax.random.uniform(
            kb, (1, hidden_out), jnp.float32, -bound, bound)

    def __call__(self, x):
        return linear_relu_pallas(x, self.w, self.b)


# ---------------------------------------------------------------------------
# WrappedModel: exact semantics of the PyTorch wrapper (pure delegation)
# ---------------------------------------------------------------------------
class WrappedModel:
    """Dummy wrapping the module (JAX/Pallas port of the PyTorch wrapper)."""

    def __init__(self, module):
        self.module = module

    def __call__(self, *args, **kwargs):
        """Forward overload: delegate everything to the wrapped module."""
        return self.module(*args, **kwargs)


if __name__ == "__main__":
    hidden = 32
    key = jax.random.PRNGKey(0)
    kx_small, kx_big = jax.random.split(key)

    model = WrappedModel(InnerLinearReLU(hidden_in=hidden, hidden_out=hidden, seed=0))
    w, b = model.module.w, model.module.b

    # 1) Tiny shape through the wrapper (XLA fast path; exact f32 semantics).
    seq = 8
    x_small = jax.random.normal(kx_small, (seq, hidden), jnp.float32)
    y_small = jax.block_until_ready(model(x_small))
    ref_small = jnp.maximum(x_small @ w + b, 0.0)
    assert y_small.shape == (seq, hidden)
    assert jnp.allclose(y_small, ref_small, atol=1e-4, rtol=1e-4)

    # 2) Larger ragged batch through the Pallas kernel, f32 operands (tight tol;
    #    also exercises the cdiv grid's partial last row block).
    B = 250
    x_big = jax.random.normal(kx_big, (B, hidden), jnp.float32)
    ref_big = jnp.maximum(x_big @ w + b, 0.0)

    y_f32 = jax.block_until_ready(
        linear_relu_pallas(x_big, w, b, use_bf16_operands=False, force_pallas=True))
    assert y_f32.shape == (B, hidden)
    assert jnp.allclose(y_f32, ref_big, atol=1e-4, rtol=1e-4)

    # 3) Same batch, default bf16 operands / f32 accumulation (v6e/v7x fast path);
    #    tolerance widened for bf16 operand rounding.
    y_bf16 = jax.block_until_ready(
        linear_relu_pallas(x_big, w, b, use_bf16_operands=True, force_pallas=True))
    assert y_bf16.shape == (B, hidden)
    assert jnp.allclose(y_bf16, ref_big, atol=5e-2, rtol=5e-2)

    print("KERNEL_OK")
</pallas_src>

<mosaic_0001>
module attributes {stable_mosaic.version = 11 : i64} {
  func.func @_linear_relu_kernel(%arg0: i32, %arg1: memref<64x32xf32, #tpu.memory_space<vmem>>, %arg2: memref<32x32xf32, #tpu.memory_space<vmem>>, %arg3: memref<1x32xf32, #tpu.memory_space<vmem>>, %arg4: memref<64x32xf32, #tpu.memory_space<vmem>>) attributes {dimension_semantics = [#tpu.dimension_semantics<parallel>], iteration_bounds = array<i64: 4>, scalar_prefetch = 0 : i64, scratch_operands = 0 : i64, tpu.core_type = #tpu.core_type<tc>, window_params = [{transform_indices = @transform_0, window_bounds = array<i64: 64, 32>}, {pipeline_mode = #tpu.pipeline_mode<synchronous>, transform_indices = @transform_1, window_bounds = array<i64: 32, 32>}, {pipeline_mode = #tpu.pipeline_mode<synchronous>, transform_indices = @transform_2, window_bounds = array<i64: 1, 32>}, {transform_indices = @transform_3, window_bounds = array<i64: 64, 32>}]} {
    %c0 = arith.constant 0 : index
    %c0_0 = arith.constant 0 : index
    %0 = vector.load %arg1[%c0, %c0_0] : memref<64x32xf32, #tpu.memory_space<vmem>>, vector<64x32xf32>
    %c0_1 = arith.constant 0 : index
    %c0_2 = arith.constant 0 : index
    %1 = vector.load %arg2[%c0_1, %c0_2] : memref<32x32xf32, #tpu.memory_space<vmem>>, vector<32x32xf32>
    %cst = arith.constant dense<0.000000e+00> : vector<64x32xf32>
    %2 = tpu.matmul %0, %1, %cst {dimension_numbers = #tpu.dot_dimension_numbers<[1], [0], [0], [1], [0, 0, 1, 1], [], []>} : vector<64x32xf32>, vector<32x32xf32>, vector<64x32xf32> -> vector<64x32xf32>
    %c0_3 = arith.constant 0 : index
    %c0_4 = arith.constant 0 : index
    %3 = vector.load %arg3[%c0_3, %c0_4] : memref<1x32xf32, #tpu.memory_space<vmem>>, vector<1x32xf32>
    %4 = vector.broadcast %3 : vector<1x32xf32> to vector<64x32xf32>
    %5 = arith.addf %2, %4 : vector<64x32xf32>
    %cst_5 = arith.constant 0.000000e+00 : f32
    %6 = vector.broadcast %cst_5 : f32 to vector<64x32xf32>
    %7 = arith.maximumf %5, %6 : vector<64x32xf32>
    %c0_6 = arith.constant 0 : index
    %c0_7 = arith.constant 0 : index
    %8 = vector.load %arg4[%c0_6, %c0_7] : memref<64x32xf32, #tpu.memory_space<vmem>>, vector<64x32xf32>
    tpu.vector_store %arg4[%c0_6, %c0_7], %7 {strides = array<i32>} : memref<64x32xf32, #tpu.memory_space<vmem>>, vector<64x32xf32>,
    return
  }
  func.func @transform_0(%arg0: i32) -> (i32, i32) {
    %c0_i32 = arith.constant 0 : i32
    %c0_i32_0 = arith.constant 0 : i32
    return %arg0, %c0_i32 : i32, i32
  }
  func.func @transform_1(%arg0: i32) -> (i32, i32) {
    %c0_i32 = arith.constant 0 : i32
    %c0_i32_0 = arith.constant 0 : i32
    %c0_i32_1 = arith.constant 0 : i32
    return %c0_i32, %c0_i32_0 : i32, i32
  }
  func.func @transform_2(%arg0: i32) -> (i32, i32) {
    %c0_i32 = arith.constant 0 : i32
    %c0_i32_0 = arith.constant 0 : i32
    %c0_i32_1 = arith.constant 0 : i32
    return %c0_i32, %c0_i32_0 : i32, i32
  }
  func.func @transform_3(%arg0: i32) -> (i32, i32) {
    %c0_i32 = arith.constant 0 : i32
    %c0_i32_0 = arith.constant 0 : i32
    return %arg0, %c0_i32 : i32, i32
  }
}

</mosaic_0001>

<llo_original>
// kernel: tpu_custom_call.1
$region0: #{tpu_custom_call.1}
  #allocation0 [shape = 'u32[]', space=smem, size = 0x4, offset = 0x4, fixed_abs, tag = 'smem constant byte address 0x4 - core index']
  #allocation1 [shape = 'u32[144,128]{1,0:T(1,128)}', space=vmem, size = 0x12000, scoped, tag = 'internal scratch']
  %s0 = inlined_call_operand.vmem [shape: f32[250,32], index: 0, kind: input, shape index: {}]
  %s1 = inlined_call_operand.vmem [shape: f32[32,32], index: 1, kind: input, shape index: {}]
  %s2 = inlined_call_operand.vmem [shape: f32[1,32], index: 2, kind: input, shape index: {}]
  %s3 = inlined_call_operand.vmem [shape: f32[250,32], index: 3, kind: output, shape index: {}]
  %s4 = sld [smem:[#allocation0]]
  $region45: #{tpu_custom_call.1} parent=0
    _
  %s6 = ssub.s32 1, %s4
  %s7 = scalar_select 0, %s6, %s4
  loop: start=0, step=1, limit=6
  $region2: #{tpu_custom_call.1} parent=0 // loop_pre_header
    _
  $region3: #{tpu_custom_call.1} parent=0 // loop_header
    %s9 = sphi 0, %s13
    %p10 = scmp.ge.s32.totalorder %s9, 6
    %s19 = sphi 0, %s21
    %s22 = sphi 0, %s19
    %s23 = sphi 0, %s22
    %s39 = sphi 0, %s23
    %s43 = sphi 0, %s43
    %s45 = sphi 0, %s43
    %s46 = sphi 0, %s45
    %s60 = sphi 0, %s46
    %s64 = sphi 0, %s64
    %s66 = sphi 0, %s64
    %s67 = sphi 0, %s66
    %s81 = sphi 0, %s67
    %s87 = sphi 0, %s89
    %s90 = sphi 0, %s87
    %s91 = sphi 0, %s90
    %s107 = sphi 0, %s91
  $region4: #{tpu_custom_call.1} parent=0 // loop_header_branch
    %12 = sbr.rel (%p10) target = $region8
  $region5: #{tpu_custom_call.1} parent=0 // loop_body
    %s14 = ssub.s32 %s9, 1
    %s15 = ssub.s32 %s9, 2
    %s16 = sadd.s32 %s9, 1
    %s17 = ssub.s32 %s9, %s16
    %p18 = scmp.eq.s32.totalorder %s17, 0
    %s20 = sadd.s32 %s19, 1
    %s21 = scalar_select %p18, %s19, %s20
    %p24 = pneg %p18
    %p25 = scmp.eq.s32.totalorder %s9, 3
    %p26 = por %p24, %p25
    %p27 = scmp.ne.s32.totalorder %s19, %s22
    %p28 = scmp.eq.s32.totalorder %s9, 0
    %p29 = por %p27, %p28
    %p30 = scmp.ne.s32.totalorder %s19, %s22
    %p31 = scmp.eq.s32.totalorder %s14, 3
    %p32 = por %p30, %p31
    %p33 = scmp.ne.s32.totalorder %s22, %s23
    %p34 = scmp.eq.s32.totalorder %s14, 0
    %p35 = por %p33, %p34
    %p36 = scmp.ne.s32.totalorder %s22, %s23
    %p37 = scmp.eq.s32.totalorder %s15, 3
    %p38 = por %p36, %p37
    %p40 = scmp.ne.s32.totalorder %s23, %s39
    %p41 = scmp.eq.s32.totalorder %s15, 0
    %p42 = por %p40, %p41
    %s44 = sadd.s32 %s43, 1
    %p47 = scmp.eq.s32.totalorder %s9, 3
    %p48 = scmp.ne.s32.totalorder %s43, %s45
    %p49 = scmp.eq.s32.totalorder %s9, 0
    %p50 = por %p48, %p49
    %p51 = scmp.ne.s32.totalorder %s43, %s45
    %p52 = scmp.eq.s32.totalorder %s14, 3
    %p53 = por %p51, %p52
    %p54 = scmp.ne.s32.totalorder %s45, %s46
    %p55 = scmp.eq.s32.totalorder %s14, 0
    %p56 = por %p54, %p55
    %p57 = scmp.ne.s32.totalorder %s45, %s46
    %p58 = scmp.eq.s32.totalorder %s15, 3
    %p59 = por %p57, %p58
    %p61 = scmp.ne.s32.totalorder %s46, %s60
    %p62 = scmp.eq.s32.totalorder %s15, 0
    %p63 = por %p61, %p62
    %s65 = sadd.s32 %s64, 1
    %p68 = scmp.eq.s32.totalorder %s9, 3
    %p69 = scmp.ne.s32.totalorder %s64, %s66
    %p70 = scmp.eq.s32.totalorder %s9, 0
    %p71 = por %p69, %p70
    %p72 = scmp.ne.s32.totalorder %s64, %s66
    %p73 = scmp.eq.s32.totalorder %s14, 3
    %p74 = por %p72, %p73
    %p75 = scmp.ne.s32.totalorder %s66, %s67
    %p76 = scmp.eq.s32.totalorder %s14, 0
    %p77 = por %p75, %p76
    %p78 = scmp.ne.s32.totalorder %s66, %s67
    %p79 = scmp.eq.s32.totalorder %s15, 3
    %p80 = por %p78, %p79
    %p82 = scmp.ne.s32.totalorder %s67, %s81
    %p83 = scmp.eq.s32.totalorder %s15, 0
    %p84 = por %p82, %p83
    %s85 = ssub.s32 %s9, %s16
    %p86 = scmp.eq.s32.totalorder %s85, 0
    %s88 = sadd.s32 %s87, 1
    %s89 = scalar_select %p86, %s87, %s88
    %p92 = pneg %p86
    %p93 = scmp.eq.s32.totalorder %s9, 3
    %p94 = por %p92, %p93
    %p95 = scmp.ne.s32.totalorder %s87, %s90
    %p96 = scmp.eq.s32.totalorder %s9, 0
    %p97 = por %p95, %p96
    %p98 = scmp.ne.s32.totalorder %s87, %s90
    %p99 = scmp.eq.s32.totalorder %s14, 3
    %p100 = por %p98, %p99
    %p101 = scmp.ne.s32.totalorder %s90, %s91
    %p102 = scmp.eq.s32.totalorder %s14, 0
    %p103 = por %p101, %p102
    %p104 = scmp.ne.s32.totalorder %s90, %s91
    %p105 = scmp.eq.s32.totalorder %s15, 3
    %p106 = por %p104, %p105
    %p108 = scmp.ne.s32.totalorder %s91, %s107
    %p109 = scmp.eq.s32.totalorder %s15, 0
    %p110 = por %p108, %p109
    %p111 = scmp.le.s32.totalorder 1, %s9
    %p112 = scmp.lt.s32.totalorder %s9, 5
    %p113 = pnand %p111, %p112
    %p114 = pneg %p113
    // Predicated region
    $region9: #{tpu_custom_call.1} parent=5 // pred_check
      _
    $region10: #{tpu_custom_call.1} parent=5 // pred_check_branch
      %116 = sbr.rel (%p113) target = $region12
    $region11: #{tpu_custom_call.1} parent=5 // pred_region
      %s117 = ssub.s32 %s9, 1
      // Predicated region
      $region13: #{tpu_custom_call.1} parent=11 // pred_check
        %p118 = pneg %p56
      $region14: #{tpu_custom_call.1} parent=11 // pred_check_branch
        %120 = sbr.rel (%p118) target = $region16
      $region15: #{tpu_custom_call.1} parent=11 // pred_region
        _
      $region16: #{tpu_custom_call.1} parent=11 // pred_fallthru
        _
      // Predicated region
      $region17: #{tpu_custom_call.1} parent=11 // pred_check
        %p121 = pneg %p77
      $region18: #{tpu_custom_call.1} parent=11 // pred_check_branch
        %123 = sbr.rel (%p121) target = $region20
      $region19: #{tpu_custom_call.1} parent=11 // pred_region
        _
      $region20: #{tpu_custom_call.1} parent=11 // pred_fallthru
        _
    $region12: #{tpu_custom_call.1} parent=5 // pred_fallthru
      _
    %p124 = scmp.lt.s32.totalorder %s9, 4
    // Predicated region
    $region21: #{tpu_custom_call.1} parent=5 // pred_check
      %p125 = pneg %p124
    $region22: #{tpu_custom_call.1} parent=5 // pred_check_branch
      %127 = sbr.rel (%p125) target = $region24
    $region23: #{tpu_custom_call.1} parent=5 // pred_region
      // Predicated region
      $region25: #{tpu_custom_call.1} parent=23 // pred_check
        %p128 = pneg %p29
      $region26: #{tpu_custom_call.1} parent=23 // pred_check_branch
        %130 = sbr.rel (%p128) target = $region28
      $region27: #{tpu_custom_call.1} parent=23 // pred_region
        %s131 = smul.u32 8, %s9
        %p132 = scmp.lt.s32.totalorder %s131, 31
        %s133 = scalar_select %p132, %s131, 31
        %s134 = smul.addr %s133, 8
        %s135 = scalar_lea.vmem %s0, %s134
        %s136 = smul.u32 8, %s9
      $region28: #{tpu_custom_call.1} parent=23 // pred_fallthru
        _
    $region24: #{tpu_custom_call.1} parent=5 // pred_fallthru
      _
    %p137 = scmp.le.s32.totalorder 1, %s9
    %p138 = scmp.lt.s32.totalorder %s9, 5
    %p139 = pnand %p137, %p138
    %p140 = pneg %p139
    // Predicated region
    $region29: #{tpu_custom_call.1} parent=5 // pred_check
      _
    $region30: #{tpu_custom_call.1} parent=5 // pred_check_branch
      %142 = sbr.rel (%p139) target = $region32
    $region31: #{tpu_custom_call.1} parent=5 // pred_region
      %s143 = ssub.s32 %s9, 1
      %s144 = smul.u32 8, %s14
      %p145 = scmp.lt.s32.totalorder %s144, 31
      %s146 = scalar_select %p145, %s144, 31
      %s147 = smul.addr %s146, 8
      %s148 = scalar_lea.vmem %s0, %s147
      %p149 = pneg %p35
      %p150 = pneg %p32
      %p151 = pneg %p56
      %p152 = pneg %p53
      %p153 = pneg %p77
      %p154 = pneg %p74
      %p155 = pneg %p103
      %p156 = pneg %p100
      %s157 = smul.u32 8, %s14
      %p158 = scmp.lt.s32.totalorder %s157, 31
      %s159 = scalar_select %p158, %s157, 31
      %s160 = smul.addr %s159, 8
      %s161 = scalar_lea.vmem %s3, %s160
      %s162 = smul.u32 8, %s14
      %p163 = scmp.lt.s32.totalorder %s162, 31
      %s164 = scalar_select %p163, %s162, 31
      %s165 = smul.addr %s164, 8
      %s166 = scalar_lea.vmem %s0, %s165
      %s167 = smul.u32 8, %s14
      %s168 = smul.u32 8, %s14
      %p169 = scmp.lt.s32.totalorder %s168, 31
      %s170 = scalar_select %p169, %s168, 31
      %s171 = smul.addr %s170, 8
      %s172 = scalar_lea.vmem %s3, %s171
      %s173 = smul.u32 8, %s14
      %v174 = vld [vmem:[%s166] sm:$0xff]
      %v175 = vld [vmem:[%s166 + $0x8] sm:$0xff]
      %v176 = vld [vmem:[%s166 + $0x10] sm:$0xff]
      %v177 = vld [vmem:[%s166 + $0x18] sm:$0xff]
      %v178 = vld [vmem:[%s166 + $0x20] sm:$0xff]
      %v179 = vld [vmem:[%s166 + $0x28] sm:$0xff]
      %v180 = vld [vmem:[%s166 + $0x30] sm:$0xff]
      %v181 = vld [vmem:[%s166 + $0x38] sm:$0xff]
      %v182 = vld [vmem:[%s1] sm:$0xff]
      %v183 = vld [vmem:[%s1 + $0x8] sm:$0xff]
      %v184 = vld [vmem:[%s1 + $0x10] sm:$0xff]
      %v185 = vld [vmem:[%s1 + $0x18] sm:$0xff]
      %v186 = vld [vmem:[%s2] sm:$0x1]
      %v188 = vlaneseq
      %v189 = vshrl.u32 %v188, 7
      %v190 = vsub.s32 0, %v189
      %v191 = vrot.slane %v186, %v190
      %vm193 = vcmask 261120
      %v195 = vsel %vm193, %v174, 0
      %v198 = vsel %vm193, %v175, 0
      %v201 = vsel %vm193, %v176, 0
      %v204 = vsel %vm193, %v177, 0
      %v207 = vsel %vm193, %v178, 0
      %v210 = vsel %vm193, %v179, 0
      %v213 = vsel %vm193, %v180, 0
      %v216 = vsel %vm193, %v181, 0
      %218 = vmatprep.subr.mxu0 0.0
      %219 = vmatpush1.msra.mxu0 0.0
      %220 = vmatprep.subr.mxu0 0.0
      %221 = vmatpush1.msra.mxu0 0.0
      %222 = vmatprep.subr.mxu0 0.0
      %223 = vmatpush1.msra.mxu0 0.0
      %224 = vmatprep.subr.mxu0 0.0
      %225 = vmatpush1.msra.mxu0 0.0
      %226 = vmatprep.subr.mxu0 0.0
      %227 = vmatpush1.msra.mxu0 0.0
      %228 = vmatprep.subr.mxu0 0.0
      %229 = vmatpush1.msra.mxu0 0.0
      %230 = vmatprep.subr.mxu0 0.0
      %231 = vmatpush1.msra.mxu0 0.0
      %232 = vmatprep.subr.mxu0 0.0
      %233 = vmatpush1.msra.mxu0 0.0
      %234 = vmatprep.subr.mxu0 0.0
      %235 = vmatpush1.msra.mxu0 0.0
      %236 = vmatprep.subr.mxu0 0.0
      %237 = vmatpush1.msra.mxu0 0.0
      %238 = vmatprep.subr.mxu0 0.0
      %239 = vmatpush1.msra.mxu0 0.0
      %240 = vmatprep.subr.mxu0 0.0
      %241 = vmatpush1.msra.mxu0 0.0
      %242 = vmatprep.subr.mxu0 0.0
      %243 = vmatpush1.msra.mxu0 %v185
      %244 = vmatprep.subr.mxu0 0.0
      %245 = vmatpush1.msra.mxu0 %v184
      %246 = vmatprep.subr.mxu0 0.0
      %247 = vmatpush1.msra.mxu0 %v183
      %248 = vmatprep.subr.mxu0 0.0
      %249 = vmatpush1.msra.mxu0 %v182
      %250 = vmatprep.subr.mxu0 0.0
      %251 = vmatpush2.msra.mxu0 0.0
      %252 = vmatprep.subr.mxu0 0.0
      %253 = vmatpush2.msra.mxu0 0.0
      %254 = vmatprep.subr.mxu0 0.0
      %255 = vmatpush2.msra.mxu0 0.0
      %256 = vmatprep.subr.mxu0 0.0
      %257 = vmatpush2.msra.mxu0 0.0
      %258 = vmatprep.subr.mxu0 0.0
      %259 = vmatpush2.msra.mxu0 0.0
      %260 = vmatprep.subr.mxu0 0.0
      %261 = vmatpush2.msra.mxu0 0.0
      %262 = vmatprep.subr.mxu0 0.0
      %263 = vmatpush2.msra.mxu0 0.0
      %264 = vmatprep.subr.mxu0 0.0
      %265 = vmatpush2.msra.mxu0 0.0
      %266 = vmatprep.subr.mxu0 0.0
      %267 = vmatpush2.msra.mxu0 0.0
      %268 = vmatprep.subr.mxu0 0.0
      %269 = vmatpush2.msra.mxu0 0.0
      %270 = vmatprep.subr.mxu0 0.0
      %271 = vmatpush2.msra.mxu0 0.0
      %272 = vmatprep.subr.mxu0 0.0
      %273 = vmatpush2.msra.mxu0 0.0
      %274 = vmatprep.subr.mxu0 0.0
      %275 = vmatpush2.msra.mxu0 0.0
      %276 = vmatprep.subr.mxu0 0.0
      %277 = vmatpush2.msra.mxu0 0.0
      %278 = vmatprep.subr.mxu0 0.0
      %279 = vmatpush2.msra.mxu0 0.0
      %280 = vmatprep.subr.mxu0 0.0
      %281 = vmatpush2.msra.mxu0 0.0
      %282 = vmatprep.mubr.f32.mxu0 0.0
      %283 = vmatmul.mubr.f32.gmra.mxu0 %v195
      %v284 = vpop.f32.mrf.mxu0
      %v285 = vadd.f32 %v191, %v284
      %v286 = vpop.f32.mrf.mxu0
      %287 = vmatprep.mubr.f32.mxu0 0.0
      %288 = vmatmul.mubr.f32.gmra.mxu0 %v198
      %v289 = vpop.f32.mrf.mxu0
      %v290 = vadd.f32 %v191, %v289
      %v291 = vpop.f32.mrf.mxu0
      %292 = vmatprep.mubr.f32.mxu0 0.0
      %293 = vmatmul.mubr.f32.gmra.mxu0 %v201
      %v294 = vpop.f32.mrf.mxu0
      %v295 = vadd.f32 %v191, %v294
      %v296 = vpop.f32.mrf.mxu0
      %297 = vmatprep.mubr.f32.mxu0 0.0
      %298 = vmatmul.mubr.f32.gmra.mxu0 %v204
      %v299 = vpop.f32.mrf.mxu0
      %v300 = vadd.f32 %v191, %v299
      %v301 = vpop.f32.mrf.mxu0
      %302 = vmatprep.mubr.f32.mxu0 0.0
      %303 = vmatmul.mubr.f32.gmra.mxu0 %v207
      %v304 = vpop.f32.mrf.mxu0
      %v305 = vadd.f32 %v191, %v304
      %v306 = vpop.f32.mrf.mxu0
      %307 = vmatprep.mubr.f32.mxu0 0.0
      %308 = vmatmul.mubr.f32.gmra.mxu0 %v210
      %v309 = vpop.f32.mrf.mxu0
      %v310 = vadd.f32 %v191, %v309
      %v311 = vpop.f32.mrf.mxu0
      %312 = vmatprep.mubr.f32.mxu0 0.0
      %313 = vmatmul.mubr.f32.gmra.mxu0 %v213
      %v314 = vpop.f32.mrf.mxu0
      %v315 = vadd.f32 %v191, %v314
      %v316 = vpop.f32.mrf.mxu0
      %317 = vmatprep.mubr.f32.mxu0 0.0
      %318 = vmatmul.mubr.f32.gmra.mxu0 %v216
      %v319 = vpop.f32.mrf.mxu0
      %v320 = vadd.f32 %v191, %v319
      %v321 = vpop.f32.mrf.mxu0
      %322 = vdwg.mxu0
      %v323 = vmax.f32 %v285, 0.0
      %v324 = vmax.f32 %v290, 0.0
      %v325 = vmax.f32 %v295, 0.0
      %v326 = vmax.f32 %v300, 0.0
      %v327 = vmax.f32 %v305, 0.0
      %v328 = vmax.f32 %v310, 0.0
      %v329 = vmax.f32 %v315, 0.0
      %v330 = vmax.f32 %v320, 0.0
      %331 = vst.msk [vmem:[%s172] sm:$0xff] %vm193, %v323
      %332 = vst.msk [vmem:[%s172 + $0x8] sm:$0xff] %vm193, %v324
      %333 = vst.msk [vmem:[%s172 + $0x10] sm:$0xff] %vm193, %v325
      %334 = vst.msk [vmem:[%s172 + $0x18] sm:$0xff] %vm193, %v326
      %335 = vst.msk [vmem:[%s172 + $0x20] sm:$0xff] %vm193, %v327
      %336 = vst.msk [vmem:[%s172 + $0x28] sm:$0xff] %vm193, %v328
      %337 = vst.msk [vmem:[%s172 + $0x30] sm:$0xff] %vm193, %v329
      %338 = vst.msk [vmem:[%s172 + $0x38] sm:$0xff] %vm193, %v330
      %s339 = smul.u32 8, %s14
      %p340 = scmp.lt.s32.totalorder %s339, 31
      %s341 = scalar_select %p340, %s339, 31
      %s342 = smul.addr %s341, 8
      %s343 = scalar_lea.vmem %s3, %s342
      // Predicated region
      $region33: #{tpu_custom_call.1} parent=31 // pred_check
        %p344 = pneg %p100
      $region34: #{tpu_custom_call.1} parent=31 // pred_check_branch
        %346 = sbr.rel (%p344) target = $region36
      $region35: #{tpu_custom_call.1} parent=31 // pred_region
        %s347 = smul.u32 8, %s14
      $region36: #{tpu_custom_call.1} parent=31 // pred_fallthru
        _
    $region32: #{tpu_custom_call.1} parent=5 // pred_fallthru
      _
    %p348 = scmp.le.s32.totalorder 2, %s9
    // Predicated region
    $region37: #{tpu_custom_call.1} parent=5 // pred_check
      %p349 = pneg %p348
    $region38: #{tpu_custom_call.1} parent=5 // pred_check_branch
      %351 = sbr.rel (%p349) target = $region40
    $region39: #{tpu_custom_call.1} parent=5 // pred_region
      %s352 = ssub.s32 %s9, 2
      // Predicated region
      $region41: #{tpu_custom_call.1} parent=39 // pred_check
        %p353 = pneg %p106
      $region42: #{tpu_custom_call.1} parent=39 // pred_check_branch
        %355 = sbr.rel (%p353) target = $region44
      $region43: #{tpu_custom_call.1} parent=39 // pred_region
        %s356 = smul.u32 8, %s15
        %p357 = scmp.lt.s32.totalorder %s356, 31
        %s358 = scalar_select %p357, %s356, 31
        %s359 = smul.addr %s358, 8
        %s360 = scalar_lea.vmem %s3, %s359
      $region44: #{tpu_custom_call.1} parent=39 // pred_fallthru
        _
    $region40: #{tpu_custom_call.1} parent=5 // pred_fallthru
      _
  $region6: #{tpu_custom_call.1} parent=0 // loop_footer
    %s13 = sadd.s32 1, %s9
  $region7: #{tpu_custom_call.1} parent=0 // loop_footer_branch
    %8 = sbr.rel target = $region3
  $region8: #{tpu_custom_call.1} parent=0 // loop_exit
    _

</llo_original>
